<compile_context>
chip_gen: v6e
topology: v6e:2x2x1
jax: 0.10.0
libtpu: 0.0.40
codegen_flags: <defaults>
</compile_context>

<pallas_src>
import jax
import jax.numpy as jnp
from jax.experimental import pallas as pl
from jax.experimental.pallas import tpu as pltpu


_LANE_CANDIDATES = (8192, 4096, 2048, 1024, 512, 256, 128)
_TARGET_BLOCK_BYTES = 8 * 1024 * 1024   # ~8 MiB per block
_VMEM_CAP_BYTES = 48 * 1024 * 1024      # leave headroom under v7x's 64 MiB VMEM
_MIN_GRID_STEPS = 4                     # pipeline overlap + v7x dual-TC sharding
_RAGGED_LANES = 1024


def _is_v5_tpu() -> bool:
    try:
        return "v5" in jax.devices()[0].device_kind.lower()
    except Exception:  # pragma: no cover - conservative fallback
        return False


def _make_hsigmoid_kernel(compute_dtype):
    def _kernel(x_ref, o_ref):
        x = x_ref[...].astype(compute_dtype)
        y = jnp.minimum(jnp.maximum(x + 3.0, 0.0), 6.0) * (1.0 / 6.0)
        o_ref[...] = y.astype(o_ref.dtype)
    return _kernel


def _sublane_multiple(itemsize: int) -> int:
    # Sub-32-bit dtypes pack rows in sublane pairs/quads.
    return {4: 8, 2: 16, 1: 32}.get(itemsize, 8)


def _run_2d(x2d: jax.Array, donate_input: bool = False) -> jax.Array:
    """Run the hsigmoid kernel over a lane-dense 2D slab (m, lanes)."""
    m, lanes = x2d.shape
    dtype = x2d.dtype
    itemsize = jnp.dtype(dtype).itemsize
    sub = _sublane_multiple(itemsize)

    # Compute dtype: native for f32; native bf16 on bf16-capable chips; else f32.
    if dtype == jnp.float32:
        compute_dtype = jnp.float32
    elif dtype == jnp.bfloat16 and not _is_v5_tpu():
        compute_dtype = jnp.bfloat16
    else:
        compute_dtype = jnp.float32

    # Block rows: ~_TARGET_BLOCK_BYTES per block, rounded to the packing multiple.
    tm = _TARGET_BLOCK_BYTES // (lanes * itemsize)
    tm = max(sub, (tm // sub) * sub)

    # Keep >= _MIN_GRID_STEPS grid steps once the array is a few MiB so the
    # pipeline overlaps DMA/compute and v7x can shard across both TensorCores.
    array_bytes = m * lanes * itemsize
    if array_bytes >= 4 * 1024 * 1024:
        cap = pl.cdiv(m, _MIN_GRID_STEPS)
        cap = max(sub, (cap // sub) * sub)
        tm = min(tm, cap)

    if tm >= m:
        tm = m  # full-extent block (also covers m < sub)

    grid = (pl.cdiv(m, tm),)
    block_bytes = tm * lanes * itemsize
    # 2 buffers each for input + output blocks, ~1.5x headroom; capped for v7x.
    vmem_limit = int(min(_VMEM_CAP_BYTES, max(16 * 1024 * 1024, 6 * block_bytes)))

    kwargs = {}
    if donate_input:
        # Only safe when the caller donates x (input dead after the call).
        kwargs["input_output_aliases"] = {0: 0}

    return pl.pallas_call(
        _make_hsigmoid_kernel(compute_dtype),
        out_shape=jax.ShapeDtypeStruct((m, lanes), dtype),
        grid_spec=pltpu.PrefetchScalarGridSpec(
            num_scalar_prefetch=0,
            grid=grid,
            in_specs=[pl.BlockSpec((tm, lanes), lambda i: (i, 0))],
            out_specs=pl.BlockSpec((tm, lanes), lambda i: (i, 0)),
        ),
        compiler_params=pltpu.CompilerParams(
            dimension_semantics=("parallel",),
            vmem_limit_bytes=vmem_limit,
        ),
        **kwargs,
    )(x2d)


def hsigmoid(x: jax.Array, donate_input: bool = False) -> jax.Array:
    """Hard sigmoid matching torch F.relu6(x + 3) / 6. Works for any shape."""
    orig_shape = x.shape
    dtype = x.dtype
    total = x.size

    if total == 0:
        return x

    # Pick the widest lane count that divides the element count (no-pad fast path).
    lanes = None
    for cand in _LANE_CANDIDATES:
        if total % cand == 0:
            lanes = cand
            break

    x_flat = jnp.ravel(x)

    if lanes is not None:
        m = total // lanes
        out2d = _run_2d(x_flat.reshape(m, lanes), donate_input=donate_input)
        return out2d.reshape(orig_shape)

    # Ragged fallback: kernel on the lane-aligned prefix, tiny (<lanes) tail in
    # plain jnp -- avoids the two extra full-tensor HBM passes of pad + slice.
    lanes = _RAGGED_LANES
    prefix = (total // lanes) * lanes
    tail = x_flat[prefix:]
    tail_out = (jnp.clip(tail.astype(jnp.float32) + 3.0, 0.0, 6.0)
                * (1.0 / 6.0)).astype(dtype)
    if prefix == 0:
        return tail_out.reshape(orig_shape)
    head2d = x_flat[:prefix].reshape(prefix // lanes, lanes)
    head_out = _run_2d(head2d).reshape(-1)
    return jnp.concatenate([head_out, tail_out]).reshape(orig_shape)


if __name__ == "__main__":
    key = jax.random.PRNGKey(0)
    # NCHW input, consistent with typical conv-net usage of HSigmoid.
    x = jax.random.normal(key, (2, 4, 16, 16), dtype=jnp.float32) * 4.0

    y = hsigmoid(x)
    jax.block_until_ready(y)

    # Correctness check against plain JAX reference (matches torch relu6(x+3)/6).
    y_ref = jnp.clip(x + 3.0, 0.0, 6.0) / 6.0
    assert y.shape == x.shape and y.dtype == x.dtype
    assert jnp.allclose(y, y_ref, atol=1e-6), "mismatch vs reference"

    # Also exercise a ragged size (prefix + jnp tail path).
    xr = jax.random.normal(jax.random.PRNGKey(1), (3, 7, 13), dtype=jnp.float32)
    yr = hsigmoid(xr)
    jax.block_until_ready(yr)
    assert jnp.allclose(yr, jnp.clip(xr + 3.0, 0.0, 6.0) / 6.0, atol=1e-6)

    print("KERNEL_OK")
</pallas_src>

<mosaic_0001>
module attributes {stable_mosaic.version = 11 : i64} {
  func.func @_kernel(%arg0: i32, %arg1: memref<1x2048xf32, #tpu.memory_space<vmem>>, %arg2: memref<1x2048xf32, #tpu.memory_space<vmem>>) attributes {dimension_semantics = [#tpu.dimension_semantics<parallel>], iteration_bounds = array<i64: 1>, scalar_prefetch = 0 : i64, scratch_operands = 0 : i64, tpu.core_type = #tpu.core_type<tc>, window_params = [{transform_indices = @transform_0, window_bounds = array<i64: 1, 2048>}, {transform_indices = @transform_1, window_bounds = array<i64: 1, 2048>}]} {
    %c0 = arith.constant 0 : index
    %c0_0 = arith.constant 0 : index
    %0 = vector.load %arg1[%c0, %c0_0] : memref<1x2048xf32, #tpu.memory_space<vmem>>, vector<1x2048xf32>
    %cst = arith.constant 3.000000e+00 : f32
    %1 = vector.broadcast %cst : f32 to vector<1x2048xf32>
    %2 = arith.addf %0, %1 : vector<1x2048xf32>
    %cst_1 = arith.constant 0.000000e+00 : f32
    %3 = vector.broadcast %cst_1 : f32 to vector<1x2048xf32>
    %4 = arith.maximumf %2, %3 : vector<1x2048xf32>
    %cst_2 = arith.constant 6.000000e+00 : f32
    %5 = vector.broadcast %cst_2 : f32 to vector<1x2048xf32>
    %6 = arith.minimumf %4, %5 : vector<1x2048xf32>
    %cst_3 = arith.constant 0.166666672 : f32
    %7 = vector.broadcast %cst_3 : f32 to vector<1x2048xf32>
    %8 = arith.mulf %6, %7 : vector<1x2048xf32>
    %c0_4 = arith.constant 0 : index
    %c0_5 = arith.constant 0 : index
    %9 = vector.load %arg2[%c0_4, %c0_5] : memref<1x2048xf32, #tpu.memory_space<vmem>>, vector<1x2048xf32>
    tpu.vector_store %arg2[%c0_4, %c0_5], %8 {strides = array<i32>} : memref<1x2048xf32, #tpu.memory_space<vmem>>, vector<1x2048xf32>,
    return
  }
  func.func @transform_0(%arg0: i32) -> (i32, i32) {
    %c0_i32 = arith.constant 0 : i32
    %c0_i32_0 = arith.constant 0 : i32
    return %arg0, %c0_i32 : i32, i32
  }
  func.func @transform_1(%arg0: i32) -> (i32, i32) {
    %c0_i32 = arith.constant 0 : i32
    %c0_i32_0 = arith.constant 0 : i32
    return %arg0, %c0_i32 : i32, i32
  }
}

</mosaic_0001>

<llo_original>
// kernel: tpu_custom_call.1
$region0: #{tpu_custom_call.1}
  #allocation0 [shape = 'u32[]', space=smem, size = 0x4, offset = 0x4, fixed_abs, tag = 'smem constant byte address 0x4 - core index']
  #allocation1 [shape = 'u32[144,128]{1,0:T(1,128)}', space=vmem, size = 0x12000, scoped, tag = 'internal scratch']
  %s0 = inlined_call_operand.hbm [shape: f32[1,2048], index: 0, kind: input, shape index: {}]
  %s1 = inlined_call_operand.hbm [shape: f32[1,2048], index: 1, kind: output, shape index: {}]
  %s2 = sld [smem:[#allocation0]]
  $region18: #{tpu_custom_call.1} parent=0
    _
  %s4 = ssub.s32 1, %s2
  %s5 = scalar_select 0, %s4, %s2
  $region1: #{tpu_custom_call.1} parent=0
    #allocation2 [shape = 'u8[8192]{0}', space=vmem, size = 0x2000, scoped, tag = 'input window, operand 0, single buffered']
    #allocation3 [shape = 's32[1]{0}', space=sflag, size = 0x4, scoped, tag = 'scoped memory for tpu_custom_call.1']
    #allocation4 [shape = 's32[1]{0}', space=sflag, size = 0x4, scoped, tag = 'scoped memory for tpu_custom_call.1']
    #allocation5 [shape = 'u8[8192]{0}', space=vmem, size = 0x2000, scoped, tag = 'output window, operand 0, single buffered']
    %6 = vsyncpa [#allocation3], 0
    %7 = vsyncpa [#allocation4], 0
    // Predicated region
    $region2: #{tpu_custom_call.1} parent=1 // pred_check
      _
    $region3: #{tpu_custom_call.1} parent=1 // pred_check_branch
      %9 = sbr.rel (0) target = $region5
    $region4: #{tpu_custom_call.1} parent=1 // pred_region
      %s11 = ssub.s32 256, 256
      %12 = vsyncadd [#allocation3], %s11
      %s14 = sshll.u32 [#allocation2], 4
      %s15 = int_to_ptr.vmem [resolvable:$true] %s14
      %17 = dma.hbm_to_vmem [thread:$0]  %s0, 256, %s15, [#allocation3]
    $region5: #{tpu_custom_call.1} parent=1 // pred_fallthru
      _
    // Predicated region
    $region6: #{tpu_custom_call.1} parent=1 // pred_check
      _
    $region7: #{tpu_custom_call.1} parent=1 // pred_check_branch
      %19 = sbr.rel (0) target = $region9
    $region8: #{tpu_custom_call.1} parent=1 // pred_region
      %20 = dma.done [#allocation3], 256
    $region9: #{tpu_custom_call.1} parent=1 // pred_fallthru
      _
    %v21 = vld [vmem:[#allocation2] sm:$0xff]
    %v22 = vld [vmem:[#allocation2 + $0x8] sm:$0xff]
    %v23 = vadd.f32 %v21, 3.0
    %v24 = vadd.f32 %v22, 3.0
    %v25 = vmax.f32 %v23, 0.0
    %v26 = vmax.f32 %v24, 0.0
    %v27 = vmin.f32 %v25, 6.0
    %v28 = vmin.f32 %v26, 6.0
    %v29 = vmul.f32 %v27, 0.16666667
    %v30 = vmul.f32 %v28, 0.16666667
    %31 = vst [vmem:[#allocation5] sm:$0xff] %v29
    %32 = vst [vmem:[#allocation5 + $0x8] sm:$0xff] %v30
    // Predicated region
    $region10: #{tpu_custom_call.1} parent=1 // pred_check
      _
    $region11: #{tpu_custom_call.1} parent=1 // pred_check_branch
      %34 = sbr.rel (0) target = $region13
    $region12: #{tpu_custom_call.1} parent=1 // pred_region
      %s36 = ssub.s32 256, 256
      %37 = vsyncadd [#allocation4], %s36
      %s39 = sshll.u32 [#allocation5], 4
      %s40 = int_to_ptr.vmem [resolvable:$true] %s39
      %42 = dma.vmem_to_hbm [thread:$0]  %s40, 256, %s1, [#allocation4]
    $region13: #{tpu_custom_call.1} parent=1 // pred_fallthru
      _
    // Predicated region
    $region14: #{tpu_custom_call.1} parent=1 // pred_check
      _
    $region15: #{tpu_custom_call.1} parent=1 // pred_check_branch
      %44 = sbr.rel (0) target = $region17
    $region16: #{tpu_custom_call.1} parent=1 // pred_region
      %45 = dma.done [#allocation4], 256
    $region17: #{tpu_custom_call.1} parent=1 // pred_fallthru
      _
    %46 = vsyncpa [#allocation3], 1
    %47 = vsyncpa [#allocation4], 1

</llo_original>
